<compile_context>
chip_gen: v6e
topology: v6e:2x2x1
jax: 0.10.0
libtpu: 0.0.40
codegen_flags: <defaults>
</compile_context>

<pallas_src>
import numpy as np

import jax
import jax.numpy as jnp
from jax.experimental import pallas as pl
from jax.experimental.pallas import tpu as pltpu


def _gamp_kernel(x_ref, p_ref, o_ref):
    # x_ref: (Rb, HWp)  rows = (n, c) pairs, spatial flattened along lanes
    # p_ref: (HWp, KK)  adaptive-avg-pool matrix (resident across grid steps)
    # o_ref: (Rb, 1)    avg-then-max pooled output
    x = x_ref[...].astype(jnp.float32)
    # All k*k adaptive-average bins at once on the MXU.
    bins = jnp.dot(x, p_ref[...], preferred_element_type=jnp.float32)  # (Rb, KK)
    # Global max over the k*k pooled grid (lane reduction).
    o_ref[...] = jnp.max(bins, axis=-1, keepdims=True).astype(o_ref.dtype)


def _adaptive_bounds(size, k, i):
    # PyTorch adaptive pooling bin: [floor(i*size/k), ceil((i+1)*size/k))
    start = (i * size) // k
    end = -(-((i + 1) * size) // k)
    return start, end


def _build_pool_matrix(H, W, k, hw_pad):
    """P[h*W + w, i*k + j] = 1/|bin(i,j)| if (h, w) lies in adaptive bin (i, j)."""
    P = np.zeros((hw_pad, k * k), dtype=np.float32)
    for i in range(k):
        h0, h1 = _adaptive_bounds(H, k, i)
        for j in range(k):
            w0, w1 = _adaptive_bounds(W, k, j)
            inv = 1.0 / ((h1 - h0) * (w1 - w0))
            for h in range(h0, h1):
                P[h * W + w0:h * W + w1, i * k + j] = inv
    return jnp.asarray(P)


def global_adaptive_max_pool2d(x, k):
    """x: (N, C, H, W) -> (N, C, 1, 1), matching the PyTorch module."""
    N, C, H, W = x.shape
    R = N * C
    HW = H * W
    KK = k * k
    itemsize = jnp.dtype(x.dtype).itemsize

    # Lane-align the flattened spatial axis only if needed (zero-copy otherwise).
    HW_pad = pl.cdiv(HW, 128) * 128
    p_mat = _build_pool_matrix(H, W, k, HW_pad)          # (HW_pad, KK) f32

    x_flat = x.reshape(R, HW)                            # free reshape
    if HW_pad != HW:
        # Zero-pad the contraction axis; P has zero rows there, results exact.
        x_flat = jnp.pad(x_flat, ((0, 0), (0, HW_pad - HW)))

    # Row tile: as many (n, c) rows per grid step as fit a ~16 MiB buffer,
    # capped at 1024; the double-buffered input block stays well under v7x's
    # 64 MiB VMEM.
    per_row = HW_pad * itemsize
    rb = int(min(1024, max(1, (16 << 20) // per_row)))
    if rb >= R:
        rb = R                       # single block: full-dim, any R allowed
    else:
        rb = max(8, (rb // 8) * 8)   # sublane-aligned tile; Pallas masks the tail block
    # TODO(synk): for extreme spatial sizes (where even an 8-row block exceeds
    # the VMEM budget) the contraction axis would need its own grid dimension
    # plus an accumulator; not needed at these shapes.
    grid = (pl.cdiv(R, rb),)

    footprint = 2 * rb * per_row + 2 * HW_pad * KK * 4 + 2 * rb * itemsize
    vmem_limit = int(min(max(footprint + (4 << 20), 16 << 20), 48 << 20))

    cost = pl.CostEstimate(
        flops=2 * R * HW_pad * KK,
        transcendentals=0,
        bytes_accessed=R * HW_pad * itemsize + HW_pad * KK * 4 + R * itemsize,
    )

    out = pl.pallas_call(
        _gamp_kernel,
        out_shape=jax.ShapeDtypeStruct((R, 1), x.dtype),
        grid_spec=pltpu.PrefetchScalarGridSpec(
            num_scalar_prefetch=0,
            grid=grid,
            in_specs=[
                pl.BlockSpec((rb, HW_pad), lambda i: (i, 0)),
                pl.BlockSpec((HW_pad, KK), lambda i: (0, 0)),   # resident weights
            ],
            out_specs=pl.BlockSpec((rb, 1), lambda i: (i, 0)),
        ),
        compiler_params=pltpu.CompilerParams(
            dimension_semantics=("parallel",),
            vmem_limit_bytes=vmem_limit,
        ),
        cost_estimate=cost,
    )(x_flat, p_mat)

    return out.reshape(N, C, 1, 1)


def _reference(x, k):
    """Pure-JAX mirror of F.adaptive_avg_pool2d(x,(k,k)) -> F.max_pool2d(.,(k,k))."""
    N, C, H, W = x.shape
    bins = []
    for i in range(k):
        h0, h1 = _adaptive_bounds(H, k, i)
        for j in range(k):
            w0, w1 = _adaptive_bounds(W, k, j)
            bins.append(jnp.mean(x[:, :, h0:h1, w0:w1], axis=(2, 3)))
    return jnp.max(jnp.stack(bins, axis=-1), axis=-1).reshape(N, C, 1, 1)


if __name__ == "__main__":
    key = jax.random.PRNGKey(0)
    k1, k2 = jax.random.split(key)

    # Case 1: small shape implied by the module: (N, C, H, W) = (2, 4, 16, 16),
    # k = 4.  Spatial 16*16 = 256 is lane-aligned -> zero-copy path.
    x1 = jax.random.normal(k1, (2, 4, 16, 16), dtype=jnp.float32)
    out1 = global_adaptive_max_pool2d(x1, k=4)
    jax.block_until_ready(out1)
    ref1 = _reference(x1, 4)
    assert out1.shape == (2, 4, 1, 1)
    assert jnp.allclose(out1, ref1, atol=1e-5, rtol=1e-5), "case 1 mismatch"

    # Case 2: non-divisible spatial (10x10 with k=3 -> overlapping adaptive
    # bins); exercises the lane-padding path and arbitrary C handling.
    x2 = jax.random.normal(k2, (2, 4, 10, 10), dtype=jnp.float32)
    out2 = global_adaptive_max_pool2d(x2, k=3)
    jax.block_until_ready(out2)
    ref2 = _reference(x2, 3)
    assert out2.shape == (2, 4, 1, 1)
    assert jnp.allclose(out2, ref2, atol=1e-5, rtol=1e-5), "case 2 mismatch"

    print("KERNEL_OK")
</pallas_src>

<mosaic_0001>
module attributes {stable_mosaic.version = 11 : i64} {
  func.func @_gamp_kernel(%arg0: i32, %arg1: memref<8x256xf32, #tpu.memory_space<vmem>>, %arg2: memref<256x16xf32, #tpu.memory_space<vmem>>, %arg3: memref<8x1xf32, #tpu.memory_space<vmem>>) attributes {dimension_semantics = [#tpu.dimension_semantics<parallel>], iteration_bounds = array<i64: 1>, scalar_prefetch = 0 : i64, scratch_operands = 0 : i64, tpu.core_type = #tpu.core_type<tc>, window_params = [{transform_indices = @transform_0, window_bounds = array<i64: 8, 256>}, {pipeline_mode = #tpu.pipeline_mode<synchronous>, transform_indices = @transform_1, window_bounds = array<i64: 256, 16>}, {transform_indices = @transform_2, window_bounds = array<i64: 8, 1>}]} {
    %c0 = arith.constant 0 : index
    %c0_0 = arith.constant 0 : index
    %0 = vector.load %arg1[%c0, %c0_0] : memref<8x256xf32, #tpu.memory_space<vmem>>, vector<8x256xf32>
    %c0_1 = arith.constant 0 : index
    %c0_2 = arith.constant 0 : index
    %1 = vector.load %arg2[%c0_1, %c0_2] : memref<256x16xf32, #tpu.memory_space<vmem>>, vector<256x16xf32>
    %cst = arith.constant dense<0.000000e+00> : vector<8x16xf32>
    %2 = tpu.matmul %0, %1, %cst {dimension_numbers = #tpu.dot_dimension_numbers<[1], [0], [0], [1], [0, 0, 1, 1], [], []>} : vector<8x256xf32>, vector<256x16xf32>, vector<8x16xf32> -> vector<8x16xf32>
    %cst_3 = arith.constant dense<0xFF800000> : vector<8xf32>
    %3 = vector.multi_reduction <maximumf>, %2, %cst_3 [1] : vector<8x16xf32> to vector<8xf32>
    %4 = vector.shape_cast %3 : vector<8xf32> to vector<8x1xf32>
    %c0_4 = arith.constant 0 : index
    %c0_5 = arith.constant 0 : index
    %5 = vector.load %arg3[%c0_4, %c0_5] : memref<8x1xf32, #tpu.memory_space<vmem>>, vector<8x1xf32>
    tpu.vector_store %arg3[%c0_4, %c0_5], %4 {strides = array<i32>} : memref<8x1xf32, #tpu.memory_space<vmem>>, vector<8x1xf32>,
    return
  }
  func.func @transform_0(%arg0: i32) -> (i32, i32) {
    %c0_i32 = arith.constant 0 : i32
    %c0_i32_0 = arith.constant 0 : i32
    return %arg0, %c0_i32 : i32, i32
  }
  func.func @transform_1(%arg0: i32) -> (i32, i32) {
    %c0_i32 = arith.constant 0 : i32
    %c0_i32_0 = arith.constant 0 : i32
    %c0_i32_1 = arith.constant 0 : i32
    return %c0_i32, %c0_i32_0 : i32, i32
  }
  func.func @transform_2(%arg0: i32) -> (i32, i32) {
    %c0_i32 = arith.constant 0 : i32
    %c0_i32_0 = arith.constant 0 : i32
    return %arg0, %c0_i32 : i32, i32
  }
}

</mosaic_0001>

<llo_original>
// kernel: tpu_custom_call.1
$region0: #{tpu_custom_call.1}
  #allocation0 [shape = 'u32[]', space=smem, size = 0x4, offset = 0x4, fixed_abs, tag = 'smem constant byte address 0x4 - core index']
  #allocation1 [shape = 'u32[144,128]{1,0:T(1,128)}', space=vmem, size = 0x12000, scoped, tag = 'internal scratch']
  %s0 = inlined_call_operand.vmem [shape: f32[8,256], index: 0, kind: input, shape index: {}]
  %s1 = inlined_call_operand.vmem [shape: f32[256,16], index: 1, kind: input, shape index: {}]
  %s2 = inlined_call_operand.vmem [shape: f32[8,1], index: 2, kind: output, shape index: {}]
  %s3 = sld [smem:[#allocation0]]
  $region18: #{tpu_custom_call.1} parent=0
    _
  %s5 = ssub.s32 1, %s3
  %s6 = scalar_select 0, %s5, %s3
  // Predicated region
  $region2: #{tpu_custom_call.1} parent=0 // pred_check
    _
  $region3: #{tpu_custom_call.1} parent=0 // pred_check_branch
    %8 = sbr.rel (0) target = $region5
  $region4: #{tpu_custom_call.1} parent=0 // pred_region
    _
  $region5: #{tpu_custom_call.1} parent=0 // pred_fallthru
    _
  // Predicated region
  $region6: #{tpu_custom_call.1} parent=0 // pred_check
    _
  $region7: #{tpu_custom_call.1} parent=0 // pred_check_branch
    %10 = sbr.rel (0) target = $region9
  $region8: #{tpu_custom_call.1} parent=0 // pred_region
    _
  $region9: #{tpu_custom_call.1} parent=0 // pred_fallthru
    _
  %v11 = vld [vmem:[%s0] sm:$0xff]
  %v12 = vld [vmem:[%s0 + $0x8] sm:$0xff]
  %v13 = vld [vmem:[%s1] sm:$0xff]
  %v14 = vld [vmem:[%s1 + $0x8] sm:$0xff]
  %v15 = vld [vmem:[%s1 + $0x10] sm:$0xff]
  %v16 = vld [vmem:[%s1 + $0x18] sm:$0xff]
  %v17 = vld [vmem:[%s1 + $0x20] sm:$0xff]
  %v18 = vld [vmem:[%s1 + $0x28] sm:$0xff]
  %v19 = vld [vmem:[%s1 + $0x30] sm:$0xff]
  %v20 = vld [vmem:[%s1 + $0x38] sm:$0xff]
  %v21 = vld [vmem:[%s1 + $0x40] sm:$0xff]
  %v22 = vld [vmem:[%s1 + $0x48] sm:$0xff]
  %v23 = vld [vmem:[%s1 + $0x50] sm:$0xff]
  %v24 = vld [vmem:[%s1 + $0x58] sm:$0xff]
  %v25 = vld [vmem:[%s1 + $0x60] sm:$0xff]
  %v26 = vld [vmem:[%s1 + $0x68] sm:$0xff]
  %v27 = vld [vmem:[%s1 + $0x70] sm:$0xff]
  %v28 = vld [vmem:[%s1 + $0x78] sm:$0xff]
  %v29 = vld [vmem:[%s1 + $0x80] sm:$0xff]
  %v30 = vld [vmem:[%s1 + $0x88] sm:$0xff]
  %v31 = vld [vmem:[%s1 + $0x90] sm:$0xff]
  %v32 = vld [vmem:[%s1 + $0x98] sm:$0xff]
  %v33 = vld [vmem:[%s1 + $0xa0] sm:$0xff]
  %v34 = vld [vmem:[%s1 + $0xa8] sm:$0xff]
  %v35 = vld [vmem:[%s1 + $0xb0] sm:$0xff]
  %v36 = vld [vmem:[%s1 + $0xb8] sm:$0xff]
  %v37 = vld [vmem:[%s1 + $0xc0] sm:$0xff]
  %v38 = vld [vmem:[%s1 + $0xc8] sm:$0xff]
  %v39 = vld [vmem:[%s1 + $0xd0] sm:$0xff]
  %v40 = vld [vmem:[%s1 + $0xd8] sm:$0xff]
  %v41 = vld [vmem:[%s1 + $0xe0] sm:$0xff]
  %v42 = vld [vmem:[%s1 + $0xe8] sm:$0xff]
  %v43 = vld [vmem:[%s1 + $0xf0] sm:$0xff]
  %v44 = vld [vmem:[%s1 + $0xf8] sm:$0xff]
  %45 = vmatprep.subr.mxu0 0.0
  %46 = vmatpush1.msra.mxu0 %v28
  %47 = vmatprep.subr.mxu0 0.0
  %48 = vmatpush1.msra.mxu0 %v27
  %49 = vmatprep.subr.mxu0 0.0
  %50 = vmatpush1.msra.mxu0 %v26
  %51 = vmatprep.subr.mxu0 0.0
  %52 = vmatpush1.msra.mxu0 %v25
  %53 = vmatprep.subr.mxu0 0.0
  %54 = vmatpush1.msra.mxu0 %v24
  %55 = vmatprep.subr.mxu0 0.0
  %56 = vmatpush1.msra.mxu0 %v23
  %57 = vmatprep.subr.mxu0 0.0
  %58 = vmatpush1.msra.mxu0 %v22
  %59 = vmatprep.subr.mxu0 0.0
  %60 = vmatpush1.msra.mxu0 %v21
  %61 = vmatprep.subr.mxu0 0.0
  %62 = vmatpush1.msra.mxu0 %v20
  %63 = vmatprep.subr.mxu0 0.0
  %64 = vmatpush1.msra.mxu0 %v19
  %65 = vmatprep.subr.mxu0 0.0
  %66 = vmatpush1.msra.mxu0 %v18
  %67 = vmatprep.subr.mxu0 0.0
  %68 = vmatpush1.msra.mxu0 %v17
  %69 = vmatprep.subr.mxu0 0.0
  %70 = vmatpush1.msra.mxu0 %v16
  %71 = vmatprep.subr.mxu0 0.0
  %72 = vmatpush1.msra.mxu0 %v15
  %73 = vmatprep.subr.mxu0 0.0
  %74 = vmatpush1.msra.mxu0 %v14
  %75 = vmatprep.subr.mxu0 0.0
  %76 = vmatpush1.msra.mxu0 %v13
  %77 = vmatprep.subr.mxu0 0.0
  %78 = vmatpush2.msra.mxu0 %v44
  %79 = vmatprep.subr.mxu0 0.0
  %80 = vmatpush2.msra.mxu0 %v43
  %81 = vmatprep.subr.mxu0 0.0
  %82 = vmatpush2.msra.mxu0 %v42
  %83 = vmatprep.subr.mxu0 0.0
  %84 = vmatpush2.msra.mxu0 %v41
  %85 = vmatprep.subr.mxu0 0.0
  %86 = vmatpush2.msra.mxu0 %v40
  %87 = vmatprep.subr.mxu0 0.0
  %88 = vmatpush2.msra.mxu0 %v39
  %89 = vmatprep.subr.mxu0 0.0
  %90 = vmatpush2.msra.mxu0 %v38
  %91 = vmatprep.subr.mxu0 0.0
  %92 = vmatpush2.msra.mxu0 %v37
  %93 = vmatprep.subr.mxu0 0.0
  %94 = vmatpush2.msra.mxu0 %v36
  %95 = vmatprep.subr.mxu0 0.0
  %96 = vmatpush2.msra.mxu0 %v35
  %97 = vmatprep.subr.mxu0 0.0
  %98 = vmatpush2.msra.mxu0 %v34
  %99 = vmatprep.subr.mxu0 0.0
  %100 = vmatpush2.msra.mxu0 %v33
  %101 = vmatprep.subr.mxu0 0.0
  %102 = vmatpush2.msra.mxu0 %v32
  %103 = vmatprep.subr.mxu0 0.0
  %104 = vmatpush2.msra.mxu0 %v31
  %105 = vmatprep.subr.mxu0 0.0
  %106 = vmatpush2.msra.mxu0 %v30
  %107 = vmatprep.subr.mxu0 0.0
  %108 = vmatpush2.msra.mxu0 %v29
  %109 = vmatprep.mubr.f32.mxu0 %v12
  %110 = vmatmul.mubr.f32.gmra.mxu0 %v11
  %v111 = vpop.f32.mrf.mxu0
  %v112 = vadd.f32 0.0, %v111
  %v113 = vpop.f32.mrf.mxu0
  %114 = vdwg.mxu0
  %vm115 = vcmask 130048
  %v116 = vsel %vm115, %v112, -inf
  %117 = vmax.xlane.f32.xlu0 %v116
  %v118 = vpop.xlane.xlu0 %117
  %vm119 = vcmask 7168
  %120 = vst.msk [vmem:[%s2] sm:$0xff] %vm119, %v118
  // Predicated region
  $region10: #{tpu_custom_call.1} parent=0 // pred_check
    _
  $region11: #{tpu_custom_call.1} parent=0 // pred_check_branch
    %122 = sbr.rel (0) target = $region13
  $region12: #{tpu_custom_call.1} parent=0 // pred_region
    _
  $region13: #{tpu_custom_call.1} parent=0 // pred_fallthru
    _
  // Predicated region
  $region14: #{tpu_custom_call.1} parent=0 // pred_check
    _
  $region15: #{tpu_custom_call.1} parent=0 // pred_check_branch
    %124 = sbr.rel (0) target = $region17
  $region16: #{tpu_custom_call.1} parent=0 // pred_region
    _
  $region17: #{tpu_custom_call.1} parent=0 // pred_fallthru
    _

</llo_original>
